<compile_context>
chip_gen: v6e
topology: v6e:2x2x1
jax: 0.10.0
libtpu: 0.0.40
codegen_flags: <defaults>
</compile_context>

<pallas_src>
import functools

import jax
import jax.numpy as jnp
from jax.experimental import pallas as pl
from jax.experimental.pallas import tpu as pltpu


def _round_up(v, m):
    return (v + m - 1) // m * m


def _markov_kernel(x_ref, stat_ref, mkv_ref, keep_ref,
                   wx_ref, ws_ref, wm_ref, b_ref, o_ref, *, nnodes):
    # x_ref:    (TB, Kx)  bf16   x flattened over (lookback, node), zero-padded
    # stat_ref: (TB, Dp)  bf16   [x_dist | x_emb | x_features | 0-pad]
    # mkv_ref:  (TB, Np)  bf16   x_markov
    # keep_ref: (TB, Np)  bf16   1.0 where not masked (0 on pad lanes/rows)
    # wx_ref:   (Kx, Np)  bf16   w1 folded through fc2_out cols and fc3
    # ws_ref:   (Dp, Np)  bf16   fc2 static cols folded through fc3
    # wm_ref:   (Np, Np)  bf16   fc3 cols for x_markov (transposed)
    # b_ref:    (1,  Np)  f32    fully fused bias (b1 -> b2 -> b3)
    # o_ref:    (TB, Np)  f32

    # Whole fc1/fc2/fc3 chain collapsed into three MXU matmuls + fused bias.
    h3 = jnp.dot(x_ref[...], wx_ref[...], preferred_element_type=jnp.float32)
    h3 = h3 + jnp.dot(stat_ref[...], ws_ref[...],
                      preferred_element_type=jnp.float32)
    h3 = h3 + jnp.dot(mkv_ref[...], wm_ref[...],
                      preferred_element_type=jnp.float32)
    h3 = h3 + b_ref[...]                                       # (TB, Np)

    # Fused softmax + masked_fill(0) + L1-renormalize.
    # max over REAL lanes only (padded lanes have h3 = 0 and could dominate).
    lane = jax.lax.broadcasted_iota(jnp.int32, h3.shape, 1)
    real = lane < nnodes
    m = jnp.max(jnp.where(real, h3, -jnp.inf), axis=1, keepdims=True)
    # masked / padded lanes go through exp(-inf) = 0 -> no inf*0 NaN anywhere;
    # all-masked rows end up all-zero (matches f.normalize's eps behaviour).
    keep = keep_ref[...] > 0
    p = jnp.exp(jnp.where(keep, h3 - m, -jnp.inf))
    inv = pl.reciprocal(jnp.maximum(jnp.sum(p, axis=1, keepdims=True), 1e-12),
                        approx=True)
    o_ref[...] = p * inv


def markov_conjunction_pred(x, x_dist, x_features, x_markov, x_week, x_mask,
                            params):
    """Forward pass of MarkovConjunctionpred (non-weekly, embedding, not DF)."""
    emb = params["embeddings"]          # (nweekdays, E)
    w1 = params["fc1_w"]                # (1, L)
    b1 = params["fc1_b"]                # (1,)
    w2 = params["fc2_w"]                # (N, 2N + E + F)
    b2 = params["fc2_b"]                # (N,)
    w3 = params["fc3_w"]                # (N, 2N)
    b3 = params["fc3_b"]                # (N,)

    B, L, N = x.shape
    E = emb.shape[1]
    F = x_features.shape[1]
    Ds = N + E + F

    f32, bf16 = jnp.float32, jnp.bfloat16

    # ---- host-side f32 weight pre-composition --------------------------------
    # fc2 input column order in PyTorch: [x_dist (N) | out (N) | emb (E) | feat (F)]
    W2_dist = w2[:, :N]
    W2_out = w2[:, N:2 * N]
    W2_ef = w2[:, 2 * N:]
    W2a = jnp.concatenate([W2_dist, W2_ef], axis=1)          # (N, Ds)
    # fc3 input column order: [h2 (N) | x_markov (N)]
    W3a = w3[:, :N]
    W3b = w3[:, N:2 * N]

    # fold biases: b1 -> through W2_out into b2; b2 -> through W3a into b3
    b2_eff = b2 + b1[0] * jnp.sum(W2_out, axis=1)             # (N,)
    b3_eff = b3 + W3a @ b2_eff                                # (N,)

    # compose the activation-free fc2∘fc3 chain (all f32 on host)
    Ws = W2a.T @ W3a.T                                        # (Ds, N)
    Wm = W3b.T                                                # (N, N)
    Wout3 = W2_out.T @ W3a.T                                  # (N, N)
    # fold fc1 into the same matmul: Wx[(l,n), m] = w1[l] * Wout3[n, m]
    Wx = (w1.reshape(L, 1, 1) * Wout3[None, :, :]).reshape(L * N, N)

    # ---- plain-JAX glue: embedding gather + static concat --------------------
    x_emb = jnp.take(emb, x_week, axis=0)                     # (B, E)
    x_dist_b = jnp.broadcast_to(x_dist[None, :], (B, N))      # (B, N)
    static = jnp.concatenate([x_dist_b, x_emb, x_features], 1)  # (B, Ds)

    # ---- pad to lane/sublane friendly shapes ----------------------------------
    Np = _round_up(N, 128)
    Dp = _round_up(Ds, 128)
    Kx = _round_up(L * N, 128)          # 640 for L=8,N=74 (vs 1024 if N padded)

    Bp8 = _round_up(B, 8)
    if Bp8 <= 8:
        TB = Bp8                        # tiny batch: single grid step
    else:
        # >=2 grid steps (both v7x TensorCores), cap at 512 rows per tile
        TB = min(512, _round_up((Bp8 + 1) // 2, 8))
    Bp = _round_up(Bp8, TB)

    def pad2(a, r, c, dtype):
        a = a.astype(dtype)
        return jnp.pad(a, ((0, r - a.shape[0]), (0, c - a.shape[1])))

    # single cast/pad pass over x (the dominant input), already flattened
    x_flat = pad2(x.reshape(B, L * N), Bp, Kx, bf16)
    static_p = pad2(static, Bp, Dp, bf16)
    markov_p = pad2(x_markov, Bp, Np, bf16)
    keep_p = pad2(x_mask == 0, Bp, Np, bf16)      # 0/1 exact in bf16

    wx_p = pad2(Wx, Kx, Np, bf16)
    ws_p = pad2(Ws, Dp, Np, bf16)
    wm_p = pad2(Wm, Np, Np, bf16)
    b_p = jnp.pad(b3_eff.astype(f32), (0, Np - N)).reshape(1, Np)

    # ---- cost estimate + VMEM budget ------------------------------------------
    flops = int(2 * Bp * Np * (Kx + Dp + Np) + 10 * Bp * Np)
    transcendentals = int(Bp * Np + Bp)
    bytes_accessed = int(
        (x_flat.size + static_p.size + markov_p.size + keep_p.size
         + wx_p.size + ws_p.size + wm_p.size) * 2
        + b_p.size * 4 + Bp * Np * 4)

    per_tile_bytes = TB * (Kx * 2 + Dp * 2 + Np * 2 + Np * 2 + Np * 4)
    resident_bytes = (wx_p.size + ws_p.size + wm_p.size) * 2 + b_p.size * 4
    vmem_limit = min(
        int(max(2 * (2 * per_tile_bytes + 2 * resident_bytes), 16 * 1024 * 1024)),
        100 * 1024 * 1024)

    kernel = functools.partial(_markov_kernel, nnodes=N)

    out = pl.pallas_call(
        kernel,
        out_shape=jax.ShapeDtypeStruct((Bp, Np), f32),
        grid=(Bp // TB,),
        in_specs=[
            pl.BlockSpec((TB, Kx), lambda i: (i, 0)),   # x (flattened)
            pl.BlockSpec((TB, Dp), lambda i: (i, 0)),   # static concat
            pl.BlockSpec((TB, Np), lambda i: (i, 0)),   # x_markov
            pl.BlockSpec((TB, Np), lambda i: (i, 0)),   # keep mask (bf16)
            pl.BlockSpec((Kx, Np), lambda i: (0, 0)),   # Wx   (resident)
            pl.BlockSpec((Dp, Np), lambda i: (0, 0)),   # Ws   (resident)
            pl.BlockSpec((Np, Np), lambda i: (0, 0)),   # Wm   (resident)
            pl.BlockSpec((1, Np), lambda i: (0, 0)),    # fused bias
        ],
        out_specs=pl.BlockSpec((TB, Np), lambda i: (i, 0)),
        compiler_params=pltpu.CompilerParams(
            dimension_semantics=("parallel",),
            vmem_limit_bytes=vmem_limit),
        cost_estimate=pl.CostEstimate(
            flops=flops, transcendentals=transcendentals,
            bytes_accessed=bytes_accessed),
    )(x_flat, static_p, markov_p, keep_p, wx_p, ws_p, wm_p, b_p)

    # TODO(synk): output kept f32 for accuracy; switch out_shape to bf16 if the
    # downstream consumer accepts it (another ~7% HBM traffic cut).
    return out[:B, :N]


def reference_jax(x, x_dist, x_features, x_markov, x_week, x_mask, params):
    """Pure-JAX f32 reference of the same forward pass (for sanity check)."""
    B, L, N = x.shape
    out1 = jnp.einsum("bln,l->bn", x, params["fc1_w"][0]) + params["fc1_b"][0]
    x_emb = jnp.take(params["embeddings"], x_week, axis=0)
    x_dist_b = jnp.broadcast_to(x_dist[None, :], (B, N))
    xcat2 = jnp.concatenate([x_dist_b, out1, x_emb, x_features], axis=1)
    h2 = xcat2 @ params["fc2_w"].T + params["fc2_b"]
    xcat3 = jnp.concatenate([h2, x_markov], axis=1)
    h3 = xcat3 @ params["fc3_w"].T + params["fc3_b"]
    p = jax.nn.softmax(h3, axis=1)
    p = jnp.where(x_mask != 0, 0.0, p)
    denom = jnp.maximum(jnp.sum(jnp.abs(p), axis=1, keepdims=True), 1e-12)
    return p / denom


if __name__ == "__main__":
    # Small shapes consistent with the module defaults.
    B = 4        # n_rows (batch of days)
    L = 8        # lookback_period
    N = 74       # nnodes
    E = 8        # embedding_size
    F = 2        # n_features
    NWEEK = 7    # nweekdays

    key = jax.random.PRNGKey(0)
    k = jax.random.split(key, 12)

    params = {
        "embeddings": jax.random.normal(k[0], (NWEEK, E), jnp.float32),
        "fc1_w": jax.random.normal(k[1], (1, L), jnp.float32) * 0.1,
        "fc1_b": jax.random.normal(k[2], (1,), jnp.float32) * 0.1,
        "fc2_w": jax.random.normal(k[3], (N, 2 * N + E + F), jnp.float32) * 0.1,
        "fc2_b": jax.random.normal(k[4], (N,), jnp.float32) * 0.1,
        "fc3_w": jax.random.normal(k[5], (N, 2 * N), jnp.float32) * 0.1,
        "fc3_b": jax.random.normal(k[6], (N,), jnp.float32) * 0.1,
    }

    x = jax.random.normal(k[7], (B, L, N), jnp.float32)            # (B, L, N)
    x_dist = jax.random.normal(k[8], (N,), jnp.float32)            # (N,)
    x_features = jax.random.normal(k[9], (B, F), jnp.float32)      # (B, F)
    x_markov = jax.random.normal(k[10], (B, N), jnp.float32)       # (B, N)
    x_week = jax.random.randint(k[11], (B,), 0, NWEEK)             # (B,) int
    x_mask = (jax.random.uniform(jax.random.PRNGKey(1), (B, N)) < 0.2
              ).astype(jnp.float32)                                # (B, N)

    out = markov_conjunction_pred(x, x_dist, x_features, x_markov, x_week,
                                  x_mask, params)
    out = jax.block_until_ready(out)

    ref = reference_jax(x, x_dist, x_features, x_markov, x_week, x_mask, params)
    assert out.shape == (B, N)
    # bf16 matmul path + approx reciprocal -> loosened tolerance vs f32 reference
    assert jnp.allclose(out, ref, atol=5e-3, rtol=4e-2), "mismatch vs JAX reference"

    print("KERNEL_OK")
</pallas_src>

<mosaic_0001>
module attributes {stable_mosaic.version = 11 : i64} {
  func.func @_markov_kernel(%arg0: i32, %arg1: memref<8x640xbf16, #tpu.memory_space<vmem>>, %arg2: memref<8x128xbf16, #tpu.memory_space<vmem>>, %arg3: memref<8x128xbf16, #tpu.memory_space<vmem>>, %arg4: memref<8x128xbf16, #tpu.memory_space<vmem>>, %arg5: memref<640x128xbf16, #tpu.memory_space<vmem>>, %arg6: memref<128x128xbf16, #tpu.memory_space<vmem>>, %arg7: memref<128x128xbf16, #tpu.memory_space<vmem>>, %arg8: memref<1x128xf32, #tpu.memory_space<vmem>>, %arg9: memref<8x128xf32, #tpu.memory_space<vmem>>) attributes {dimension_semantics = [#tpu.dimension_semantics<parallel>], iteration_bounds = array<i64: 1>, scalar_prefetch = 0 : i64, scratch_operands = 0 : i64, tpu.core_type = #tpu.core_type<tc>, window_params = [{transform_indices = @transform_0, window_bounds = array<i64: 8, 640>}, {transform_indices = @transform_1, window_bounds = array<i64: 8, 128>}, {transform_indices = @transform_2, window_bounds = array<i64: 8, 128>}, {transform_indices = @transform_3, window_bounds = array<i64: 8, 128>}, {pipeline_mode = #tpu.pipeline_mode<synchronous>, transform_indices = @transform_4, window_bounds = array<i64: 640, 128>}, {pipeline_mode = #tpu.pipeline_mode<synchronous>, transform_indices = @transform_5, window_bounds = array<i64: 128, 128>}, {pipeline_mode = #tpu.pipeline_mode<synchronous>, transform_indices = @transform_6, window_bounds = array<i64: 128, 128>}, {pipeline_mode = #tpu.pipeline_mode<synchronous>, transform_indices = @transform_7, window_bounds = array<i64: 1, 128>}, {transform_indices = @transform_8, window_bounds = array<i64: 8, 128>}]} {
    %c0 = arith.constant 0 : index
    %c0_0 = arith.constant 0 : index
    %0 = vector.load %arg1[%c0, %c0_0] : memref<8x640xbf16, #tpu.memory_space<vmem>>, vector<8x640xbf16>
    %c0_1 = arith.constant 0 : index
    %c0_2 = arith.constant 0 : index
    %1 = vector.load %arg5[%c0_1, %c0_2] : memref<640x128xbf16, #tpu.memory_space<vmem>>, vector<640x128xbf16>
    %cst = arith.constant dense<0.000000e+00> : vector<8x128xf32>
    %2 = tpu.matmul %0, %1, %cst {dimension_numbers = #tpu.dot_dimension_numbers<[1], [0], [0], [1], [0, 0, 1, 1], [], []>} : vector<8x640xbf16>, vector<640x128xbf16>, vector<8x128xf32> -> vector<8x128xf32>
    %c0_3 = arith.constant 0 : index
    %c0_4 = arith.constant 0 : index
    %3 = vector.load %arg2[%c0_3, %c0_4] : memref<8x128xbf16, #tpu.memory_space<vmem>>, vector<8x128xbf16>
    %c0_5 = arith.constant 0 : index
    %c0_6 = arith.constant 0 : index
    %4 = vector.load %arg6[%c0_5, %c0_6] : memref<128x128xbf16, #tpu.memory_space<vmem>>, vector<128x128xbf16>
    %cst_7 = arith.constant dense<0.000000e+00> : vector<8x128xf32>
    %5 = tpu.matmul %3, %4, %cst_7 {dimension_numbers = #tpu.dot_dimension_numbers<[1], [0], [0], [1], [0, 0, 1, 1], [], []>} : vector<8x128xbf16>, vector<128x128xbf16>, vector<8x128xf32> -> vector<8x128xf32>
    %6 = arith.addf %2, %5 : vector<8x128xf32>
    %c0_8 = arith.constant 0 : index
    %c0_9 = arith.constant 0 : index
    %7 = vector.load %arg3[%c0_8, %c0_9] : memref<8x128xbf16, #tpu.memory_space<vmem>>, vector<8x128xbf16>
    %c0_10 = arith.constant 0 : index
    %c0_11 = arith.constant 0 : index
    %8 = vector.load %arg7[%c0_10, %c0_11] : memref<128x128xbf16, #tpu.memory_space<vmem>>, vector<128x128xbf16>
    %cst_12 = arith.constant dense<0.000000e+00> : vector<8x128xf32>
    %9 = tpu.matmul %7, %8, %cst_12 {dimension_numbers = #tpu.dot_dimension_numbers<[1], [0], [0], [1], [0, 0, 1, 1], [], []>} : vector<8x128xbf16>, vector<128x128xbf16>, vector<8x128xf32> -> vector<8x128xf32>
    %10 = arith.addf %6, %9 : vector<8x128xf32>
    %c0_13 = arith.constant 0 : index
    %c0_14 = arith.constant 0 : index
    %11 = vector.load %arg8[%c0_13, %c0_14] : memref<1x128xf32, #tpu.memory_space<vmem>>, vector<1x128xf32>
    %12 = vector.broadcast %11 : vector<1x128xf32> to vector<8x128xf32>
    %13 = arith.addf %10, %12 : vector<8x128xf32>
    %14 = tpu.iota {dimensions = array<i32: 1>} : vector<8x128xi32>
    %c74_i32 = arith.constant 74 : i32
    %15 = vector.broadcast %c74_i32 : i32 to vector<8x128xi32>
    %16 = arith.cmpi slt, %14, %15 : vector<8x128xi32>
    %cst_15 = arith.constant 0xFF800000 : f32
    %17 = vector.broadcast %cst_15 : f32 to vector<8x128xf32>
    %18 = arith.select %16, %13, %17 : vector<8x128xi1>, vector<8x128xf32>
    %cst_16 = arith.constant dense<0xFF800000> : vector<8xf32>
    %19 = vector.multi_reduction <maximumf>, %18, %cst_16 [1] : vector<8x128xf32> to vector<8xf32>
    %20 = vector.shape_cast %19 : vector<8xf32> to vector<8x1xf32>
    %c0_17 = arith.constant 0 : index
    %c0_18 = arith.constant 0 : index
    %21 = vector.load %arg4[%c0_17, %c0_18] : memref<8x128xbf16, #tpu.memory_space<vmem>>, vector<8x128xbf16>
    %cst_19 = arith.constant 0.000000e+00 : bf16
    %22 = vector.broadcast %cst_19 : bf16 to vector<8x128xbf16>
    %23 = arith.cmpf ogt, %21, %22 : vector<8x128xbf16>
    %24 = vector.broadcast %20 : vector<8x1xf32> to vector<8x128xf32>
    %25 = arith.subf %13, %24 : vector<8x128xf32>
    %cst_20 = arith.constant 0xFF800000 : f32
    %26 = vector.broadcast %cst_20 : f32 to vector<8x128xf32>
    %27 = arith.select %23, %25, %26 : vector<8x128xi1>, vector<8x128xf32>
    %28 = math.exp %27 : vector<8x128xf32>
    %cst_21 = arith.constant dense<0.000000e+00> : vector<8xf32>
    %29 = vector.multi_reduction <add>, %28, %cst_21 [1] : vector<8x128xf32> to vector<8xf32>
    %30 = vector.shape_cast %29 : vector<8xf32> to vector<8x1xf32>
    %cst_22 = arith.constant 9.99999996E-13 : f32
    %31 = vector.broadcast %cst_22 : f32 to vector<8x1xf32>
    %32 = arith.maximumf %30, %31 : vector<8x1xf32>
    %33 = tpu.reciprocal %32 {approx = true} : vector<8x1xf32> -> vector<8x1xf32>
    %34 = vector.broadcast %33 : vector<8x1xf32> to vector<8x128xf32>
    %35 = arith.mulf %28, %34 : vector<8x128xf32>
    %c0_23 = arith.constant 0 : index
    %c0_24 = arith.constant 0 : index
    %36 = vector.load %arg9[%c0_23, %c0_24] : memref<8x128xf32, #tpu.memory_space<vmem>>, vector<8x128xf32>
    tpu.vector_store %arg9[%c0_23, %c0_24], %35 {strides = array<i32>} : memref<8x128xf32, #tpu.memory_space<vmem>>, vector<8x128xf32>,
    return
  }
  func.func @transform_0(%arg0: i32) -> (i32, i32) {
    %c0_i32 = arith.constant 0 : i32
    %c0_i32_0 = arith.constant 0 : i32
    return %arg0, %c0_i32 : i32, i32
  }
  func.func @transform_1(%arg0: i32) -> (i32, i32) {
    %c0_i32 = arith.constant 0 : i32
    %c0_i32_0 = arith.constant 0 : i32
    return %arg0, %c0_i32 : i32, i32
  }
  func.func @transform_2(%arg0: i32) -> (i32, i32) {
    %c0_i32 = arith.constant 0 : i32
    %c0_i32_0 = arith.constant 0 : i32
    return %arg0, %c0_i32 : i32, i32
  }
  func.func @transform_3(%arg0: i32) -> (i32, i32) {
    %c0_i32 = arith.constant 0 : i32
    %c0_i32_0 = arith.constant 0 : i32
    return %arg0, %c0_i32 : i32, i32
  }
  func.func @transform_4(%arg0: i32) -> (i32, i32) {
    %c0_i32 = arith.constant 0 : i32
    %c0_i32_0 = arith.constant 0 : i32
    %c0_i32_1 = arith.constant 0 : i32
    return %c0_i32, %c0_i32_0 : i32, i32
  }
  func.func @transform_5(%arg0: i32) -> (i32, i32) {
    %c0_i32 = arith.constant 0 : i32
    %c0_i32_0 = arith.constant 0 : i32
    %c0_i32_1 = arith.constant 0 : i32
    return %c0_i32, %c0_i32_0 : i32, i32
  }
  func.func @transform_6(%arg0: i32) -> (i32, i32) {
    %c0_i32 = arith.constant 0 : i32
    %c0_i32_0 = arith.constant 0 : i32
    %c0_i32_1 = arith.constant 0 : i32
    return %c0_i32, %c0_i32_0 : i32, i32
  }
  func.func @transform_7(%arg0: i32) -> (i32, i32) {
    %c0_i32 = arith.constant 0 : i32
    %c0_i32_0 = arith.constant 0 : i32
    %c0_i32_1 = arith.constant 0 : i32
    return %c0_i32, %c0_i32_0 : i32, i32
  }
  func.func @transform_8(%arg0: i32) -> (i32, i32) {
    %c0_i32 = arith.constant 0 : i32
    %c0_i32_0 = arith.constant 0 : i32
    return %arg0, %c0_i32 : i32, i32
  }
}

</mosaic_0001>

<llo_original>
// kernel: tpu_custom_call.1
$region0: #{tpu_custom_call.1}
  #allocation0 [shape = 'u32[]', space=smem, size = 0x4, offset = 0x4, fixed_abs, tag = 'smem constant byte address 0x4 - core index']
  #allocation1 [shape = 'u32[144,128]{1,0:T(1,128)}', space=vmem, size = 0x12000, scoped, tag = 'internal scratch']
  %s0 = inlined_call_operand.hbm [shape: bf16[8,640], index: 0, kind: input, shape index: {}]
  %s1 = inlined_call_operand.hbm [shape: bf16[8,128], index: 1, kind: input, shape index: {}]
  %s2 = inlined_call_operand.hbm [shape: bf16[8,128], index: 2, kind: input, shape index: {}]
  %s3 = inlined_call_operand.vmem [shape: bf16[8,128], index: 3, kind: input, shape index: {}]
  %s4 = inlined_call_operand.hbm [shape: bf16[640,128], index: 4, kind: input, shape index: {}]
  %s5 = inlined_call_operand.hbm [shape: bf16[128,128], index: 5, kind: input, shape index: {}]
  %s6 = inlined_call_operand.hbm [shape: bf16[128,128], index: 6, kind: input, shape index: {}]
  %s7 = inlined_call_operand.vmem [shape: f32[1,128], index: 7, kind: input, shape index: {}]
  %s8 = inlined_call_operand.hbm [shape: f32[8,128], index: 8, kind: output, shape index: {}]
  %s9 = sld [smem:[#allocation0]]
  $region66: #{tpu_custom_call.1} parent=0
    _
  %s11 = ssub.s32 1, %s9
  %s12 = scalar_select 0, %s11, %s9
  $region1: #{tpu_custom_call.1} parent=0
    #allocation2 [shape = 'u8[10240]{0}', space=vmem, size = 0x2800, scoped, tag = 'input window, operand 0, single buffered']
    #allocation3 [shape = 's32[1]{0}', space=sflag, size = 0x4, scoped, tag = 'scoped memory for tpu_custom_call.1']
    #allocation4 [shape = 's32[1]{0}', space=sflag, size = 0x4, scoped, tag = 'scoped memory for tpu_custom_call.1']
    #allocation5 [shape = 'u8[2048]{0}', space=vmem, size = 0x800, scoped, tag = 'input window, operand 1, single buffered']
    #allocation6 [shape = 's32[1]{0}', space=sflag, size = 0x4, scoped, tag = 'scoped memory for tpu_custom_call.1']
    #allocation7 [shape = 'u8[2048]{0}', space=vmem, size = 0x800, scoped, tag = 'input window, operand 2, single buffered']
    #allocation8 [shape = 'u8[163840]{0}', space=vmem, size = 0x28000, scoped, tag = 'input window, operand 4, single buffered']
    #allocation9 [shape = 's32[1]{0}', space=sflag, size = 0x4, scoped, tag = 'scoped memory for tpu_custom_call.1']
    #allocation10 [shape = 'u8[32768]{0}', space=vmem, size = 0x8000, scoped, tag = 'input window, operand 5, single buffered']
    #allocation11 [shape = 'u8[32768]{0}', space=vmem, size = 0x8000, scoped, tag = 'input window, operand 6, single buffered']
    #allocation12 [shape = 's32[1]{0}', space=sflag, size = 0x4, scoped, tag = 'scoped memory for tpu_custom_call.1']
    #allocation13 [shape = 'u8[4096]{0}', space=vmem, size = 0x1000, scoped, tag = 'output window, operand 0, single buffered']
    %13 = vsyncpa [#allocation3], 0
    %14 = vsyncpa [#allocation6], 0
    %15 = vsyncpa [#allocation9], 0
    %16 = vsyncpa [#allocation12], 0
    %17 = vsyncpa [#allocation4], 0
    // Predicated region
    $region2: #{tpu_custom_call.1} parent=1 // pred_check
      _
    $region3: #{tpu_custom_call.1} parent=1 // pred_check_branch
      %19 = sbr.rel (0) target = $region5
    $region4: #{tpu_custom_call.1} parent=1 // pred_region
      %s21 = ssub.s32 320, 320
      %22 = vsyncadd [#allocation3], %s21
      %s24 = sshll.u32 [#allocation2], 4
      %s25 = int_to_ptr.vmem [resolvable:$true] %s24
      %27 = dma.hbm_to_vmem [thread:$0]  %s0, 320, %s25, [#allocation3]
    $region5: #{tpu_custom_call.1} parent=1 // pred_fallthru
      _
    // Predicated region
    $region6: #{tpu_custom_call.1} parent=1 // pred_check
      _
    $region7: #{tpu_custom_call.1} parent=1 // pred_check_branch
      %29 = sbr.rel (0) target = $region9
    $region8: #{tpu_custom_call.1} parent=1 // pred_region
      %s31 = ssub.s32 64, 64
      %32 = vsyncadd [#allocation6], %s31
      %s34 = sshll.u32 [#allocation5], 4
      %s35 = int_to_ptr.vmem [resolvable:$true] %s34
      %37 = dma.hbm_to_vmem [thread:$0]  %s1, 64, %s35, [#allocation6]
    $region9: #{tpu_custom_call.1} parent=1 // pred_fallthru
      _
    // Predicated region
    $region10: #{tpu_custom_call.1} parent=1 // pred_check
      _
    $region11: #{tpu_custom_call.1} parent=1 // pred_check_branch
      %39 = sbr.rel (0) target = $region13
    $region12: #{tpu_custom_call.1} parent=1 // pred_region
      %s41 = ssub.s32 64, 64
      %42 = vsyncadd [#allocation6], %s41
      %s44 = sshll.u32 [#allocation7], 4
      %s45 = int_to_ptr.vmem [resolvable:$true] %s44
      %47 = dma.hbm_to_vmem [thread:$0]  %s2, 64, %s45, [#allocation6]
    $region13: #{tpu_custom_call.1} parent=1 // pred_fallthru
      _
    // Predicated region
    $region14: #{tpu_custom_call.1} parent=1 // pred_check
      _
    $region15: #{tpu_custom_call.1} parent=1 // pred_check_branch
      %49 = sbr.rel (0) target = $region17
    $region16: #{tpu_custom_call.1} parent=1 // pred_region
      _
    $region17: #{tpu_custom_call.1} parent=1 // pred_fallthru
      _
    // Predicated region
    $region18: #{tpu_custom_call.1} parent=1 // pred_check
      _
    $region19: #{tpu_custom_call.1} parent=1 // pred_check_branch
      %51 = sbr.rel (0) target = $region21
    $region20: #{tpu_custom_call.1} parent=1 // pred_region
      %s53 = ssub.s32 5120, 5120
      %54 = vsyncadd [#allocation9], %s53
      %s55 = sshll.u32 [#allocation8], 4
      %s56 = int_to_ptr.vmem [resolvable:$true] %s55
      %61 = dma.hbm_to_vmem [thread:$0]  %s4, 5120, %s56, [#allocation9], 64, 64, 4
    $region21: #{tpu_custom_call.1} parent=1 // pred_fallthru
      _
    // Predicated region
    $region22: #{tpu_custom_call.1} parent=1 // pred_check
      _
    $region23: #{tpu_custom_call.1} parent=1 // pred_check_branch
      %63 = sbr.rel (0) target = $region25
    $region24: #{tpu_custom_call.1} parent=1 // pred_region
      %s65 = ssub.s32 1024, 1024
      %66 = vsyncadd [#allocation9], %s65
      %s67 = sshll.u32 [#allocation10], 4
      %s68 = int_to_ptr.vmem [resolvable:$true] %s67
      %73 = dma.hbm_to_vmem [thread:$0]  %s5, 1024, %s68, [#allocation9], 64, 64, 4
    $region25: #{tpu_custom_call.1} parent=1 // pred_fallthru
      _
    // Predicated region
    $region26: #{tpu_custom_call.1} parent=1 // pred_check
      _
    $region27: #{tpu_custom_call.1} parent=1 // pred_check_branch
      %75 = sbr.rel (0) target = $region29
    $region28: #{tpu_custom_call.1} parent=1 // pred_region
      %s77 = ssub.s32 1024, 1024
      %78 = vsyncadd [#allocation12], %s77
      %s79 = sshll.u32 [#allocation11], 4
      %s80 = int_to_ptr.vmem [resolvable:$true] %s79
      %85 = dma.hbm_to_vmem [thread:$0]  %s6, 1024, %s80, [#allocation12], 64, 64, 4
    $region29: #{tpu_custom_call.1} parent=1 // pred_fallthru
      _
    // Predicated region
    $region30: #{tpu_custom_call.1} parent=1 // pred_check
      _
    $region31: #{tpu_custom_call.1} parent=1 // pred_check_branch
      %87 = sbr.rel (0) target = $region33
    $region32: #{tpu_custom_call.1} parent=1 // pred_region
      _
    $region33: #{tpu_custom_call.1} parent=1 // pred_fallthru
      _
    // Predicated region
    $region34: #{tpu_custom_call.1} parent=1 // pred_check
      _
    $region35: #{tpu_custom_call.1} parent=1 // pred_check_branch
      %89 = sbr.rel (0) target = $region37
    $region36: #{tpu_custom_call.1} parent=1 // pred_region
      %90 = dma.done [#allocation3], 320
    $region37: #{tpu_custom_call.1} parent=1 // pred_fallthru
      _
    // Predicated region
    $region38: #{tpu_custom_call.1} parent=1 // pred_check
      _
    $region39: #{tpu_custom_call.1} parent=1 // pred_check_branch
      %92 = sbr.rel (0) target = $region41
    $region40: #{tpu_custom_call.1} parent=1 // pred_region
      %93 = dma.done [#allocation6], 64
    $region41: #{tpu_custom_call.1} parent=1 // pred_fallthru
      _
    // Predicated region
    $region42: #{tpu_custom_call.1} parent=1 // pred_check
      _
    $region43: #{tpu_custom_call.1} parent=1 // pred_check_branch
      %95 = sbr.rel (0) target = $region45
    $region44: #{tpu_custom_call.1} parent=1 // pred_region
      %96 = dma.done [#allocation6], 64
    $region45: #{tpu_custom_call.1} parent=1 // pred_fallthru
      _
    // Predicated region
    $region46: #{tpu_custom_call.1} parent=1 // pred_check
      _
    $region47: #{tpu_custom_call.1} parent=1 // pred_check_branch
      %98 = sbr.rel (0) target = $region49
    $region48: #{tpu_custom_call.1} parent=1 // pred_region
      %99 = dma.done [#allocation9], 5120
    $region49: #{tpu_custom_call.1} parent=1 // pred_fallthru
      _
    // Predicated region
    $region50: #{tpu_custom_call.1} parent=1 // pred_check
      _
    $region51: #{tpu_custom_call.1} parent=1 // pred_check_branch
      %101 = sbr.rel (0) target = $region53
    $region52: #{tpu_custom_call.1} parent=1 // pred_region
      %102 = dma.done [#allocation9], 1024
    $region53: #{tpu_custom_call.1} parent=1 // pred_fallthru
      _
    // Predicated region
    $region54: #{tpu_custom_call.1} parent=1 // pred_check
      _
    $region55: #{tpu_custom_call.1} parent=1 // pred_check_branch
      %104 = sbr.rel (0) target = $region57
    $region56: #{tpu_custom_call.1} parent=1 // pred_region
      %105 = dma.done [#allocation12], 1024
    $region57: #{tpu_custom_call.1} parent=1 // pred_fallthru
      _
    %v109 = vld [vmem:[#allocation2] sm:$0xff]
    %v110 = vld [vmem:[#allocation2 + $0x8] sm:$0xff]
    %v111 = vld [vmem:[#allocation2 + $0x10] sm:$0xf]
    %v112 = vld [vmem:[#allocation8] sm:$0xf]
    %v113 = vld [vmem:[#allocation8 + $0x4] sm:$0xf]
    %v114 = vld [vmem:[#allocation8 + $0x8] sm:$0xf]
    %v115 = vld [vmem:[#allocation8 + $0xc] sm:$0xf]
    %v116 = vld [vmem:[#allocation8 + $0x10] sm:$0xf]
    %v117 = vld [vmem:[#allocation8 + $0x14] sm:$0xf]
    %v118 = vld [vmem:[#allocation8 + $0x18] sm:$0xf]
    %v119 = vld [vmem:[#allocation8 + $0x1c] sm:$0xf]
    %v120 = vld [vmem:[#allocation8 + $0x20] sm:$0xf]
    %v121 = vld [vmem:[#allocation8 + $0x24] sm:$0xf]
    %v122 = vld [vmem:[#allocation8 + $0x28] sm:$0xf]
    %v123 = vld [vmem:[#allocation8 + $0x2c] sm:$0xf]
    %v124 = vld [vmem:[#allocation8 + $0x30] sm:$0xf]
    %v125 = vld [vmem:[#allocation8 + $0x34] sm:$0xf]
    %v126 = vld [vmem:[#allocation8 + $0x38] sm:$0xf]
    %v127 = vld [vmem:[#allocation8 + $0x3c] sm:$0xf]
    %v128 = vld [vmem:[#allocation8 + $0x40] sm:$0xf]
    %v129 = vld [vmem:[#allocation8 + $0x44] sm:$0xf]
    %v130 = vld [vmem:[#allocation8 + $0x48] sm:$0xf]
    %v131 = vld [vmem:[#allocation8 + $0x4c] sm:$0xf]
    %v132 = vld [vmem:[#allocation8 + $0x50] sm:$0xf]
    %v133 = vld [vmem:[#allocation8 + $0x54] sm:$0xf]
    %v134 = vld [vmem:[#allocation8 + $0x58] sm:$0xf]
    %v135 = vld [vmem:[#allocation8 + $0x5c] sm:$0xf]
    %v136 = vld [vmem:[#allocation8 + $0x60] sm:$0xf]
    %v137 = vld [vmem:[#allocation8 + $0x64] sm:$0xf]
    %v138 = vld [vmem:[#allocation8 + $0x68] sm:$0xf]
    %v139 = vld [vmem:[#allocation8 + $0x6c] sm:$0xf]
    %v140 = vld [vmem:[#allocation8 + $0x70] sm:$0xf]
    %v141 = vld [vmem:[#allocation8 + $0x74] sm:$0xf]
    %v142 = vld [vmem:[#allocation8 + $0x78] sm:$0xf]
    %v143 = vld [vmem:[#allocation8 + $0x7c] sm:$0xf]
    %v144 = vld [vmem:[#allocation8 + $0x80] sm:$0xf]
    %v145 = vld [vmem:[#allocation8 + $0x84] sm:$0xf]
    %v146 = vld [vmem:[#allocation8 + $0x88] sm:$0xf]
    %v147 = vld [vmem:[#allocation8 + $0x8c] sm:$0xf]
    %v148 = vld [vmem:[#allocation8 + $0x90] sm:$0xf]
    %v149 = vld [vmem:[#allocation8 + $0x94] sm:$0xf]
    %v150 = vld [vmem:[#allocation8 + $0x98] sm:$0xf]
    %v151 = vld [vmem:[#allocation8 + $0x9c] sm:$0xf]
    %v152 = vld [vmem:[#allocation8 + $0xa0] sm:$0xf]
    %v153 = vld [vmem:[#allocation8 + $0xa4] sm:$0xf]
    %v154 = vld [vmem:[#allocation8 + $0xa8] sm:$0xf]
    %v155 = vld [vmem:[#allocation8 + $0xac] sm:$0xf]
    %v156 = vld [vmem:[#allocation8 + $0xb0] sm:$0xf]
    %v157 = vld [vmem:[#allocation8 + $0xb4] sm:$0xf]
    %v158 = vld [vmem:[#allocation8 + $0xb8] sm:$0xf]
    %v159 = vld [vmem:[#allocation8 + $0xbc] sm:$0xf]
    %v160 = vld [vmem:[#allocation8 + $0xc0] sm:$0xf]
    %v161 = vld [vmem:[#allocation8 + $0xc4] sm:$0xf]
    %v162 = vld [vmem:[#allocation8 + $0xc8] sm:$0xf]
    %v163 = vld [vmem:[#allocation8 + $0xcc] sm:$0xf]
    %v164 = vld [vmem:[#allocation8 + $0xd0] sm:$0xf]
    %v165 = vld [vmem:[#allocation8 + $0xd4] sm:$0xf]
    %v166 = vld [vmem:[#allocation8 + $0xd8] sm:$0xf]
    %v167 = vld [vmem:[#allocation8 + $0xdc] sm:$0xf]
    %v168 = vld [vmem:[#allocation8 + $0xe0] sm:$0xf]
    %v169 = vld [vmem:[#allocation8 + $0xe4] sm:$0xf]
    %v170 = vld [vmem:[#allocation8 + $0xe8] sm:$0xf]
    %v171 = vld [vmem:[#allocation8 + $0xec] sm:$0xf]
    %v172 = vld [vmem:[#allocation8 + $0xf0] sm:$0xf]
    %v173 = vld [vmem:[#allocation8 + $0xf4] sm:$0xf]
    %v174 = vld [vmem:[#allocation8 + $0xf8] sm:$0xf]
    %v175 = vld [vmem:[#allocation8 + $0xfc] sm:$0xf]
    %v176 = vld [vmem:[#allocation8 + $0x100] sm:$0xf]
    %v177 = vld [vmem:[#allocation8 + $0x104] sm:$0xf]
    %v178 = vld [vmem:[#allocation8 + $0x108] sm:$0xf]
    %v179 = vld [vmem:[#allocation8 + $0x10c] sm:$0xf]
    %v180 = vld [vmem:[#allocation8 + $0x110] sm:$0xf]
    %v181 = vld [vmem:[#allocation8 + $0x114] sm:$0xf]
    %v182 = vld [vmem:[#allocation8 + $0x118] sm:$0xf]
    %v183 = vld [vmem:[#allocation8 + $0x11c] sm:$0xf]
    %v184 = vld [vmem:[#allocation8 + $0x120] sm:$0xf]
    %v185 = vld [vmem:[#allocation8 + $0x124] sm:$0xf]
    %v186 = vld [vmem:[#allocation8 + $0x128] sm:$0xf]
    %v187 = vld [vmem:[#allocation8 + $0x12c] sm:$0xf]
    %v188 = vld [vmem:[#allocation8 + $0x130] sm:$0xf]
    %v189 = vld [vmem:[#allocation8 + $0x134] sm:$0xf]
    %v190 = vld [vmem:[#allocation8 + $0x138] sm:$0xf]
    %v191 = vld [vmem:[#allocation8 + $0x13c] sm:$0xf]
    %v192 = vld [vmem:[#allocation5] sm:$0xf]
    %v193 = vld [vmem:[#allocation10] sm:$0xf]
    %v194 = vld [vmem:[#allocation10 + $0x4] sm:$0xf]
    %v195 = vld [vmem:[#allocation10 + $0x8] sm:$0xf]
    %v196 = vld [vmem:[#allocation10 + $0xc] sm:$0xf]
    %v197 = vld [vmem:[#allocation10 + $0x10] sm:$0xf]
    %v198 = vld [vmem:[#allocation10 + $0x14] sm:$0xf]
    %v199 = vld [vmem:[#allocation10 + $0x18] sm:$0xf]
    %v200 = vld [vmem:[#allocation10 + $0x1c] sm:$0xf]
    %v201 = vld [vmem:[#allocation10 + $0x20] sm:$0xf]
    %v202 = vld [vmem:[#allocation10 + $0x24] sm:$0xf]
    %v203 = vld [vmem:[#allocation10 + $0x28] sm:$0xf]
    %v204 = vld [vmem:[#allocation10 + $0x2c] sm:$0xf]
    %v205 = vld [vmem:[#allocation10 + $0x30] sm:$0xf]
    %v206 = vld [vmem:[#allocation10 + $0x34] sm:$0xf]
    %v207 = vld [vmem:[#allocation10 + $0x38] sm:$0xf]
    %v208 = vld [vmem:[#allocation10 + $0x3c] sm:$0xf]
    %v225 = vunpack.c.l.b16 %v193
    %v226 = vunpack.c.l.b16 %v194
    %v227 = vunpack.c.l.b16 %v195
    %v228 = vunpack.c.l.b16 %v196
    %v229 = vunpack.c.l.b16 %v197
    %v230 = vunpack.c.l.b16 %v198
    %v231 = vunpack.c.l.b16 %v199
    %v232 = vunpack.c.l.b16 %v200
    %v233 = vunpack.c.l.b16 %v201
    %v234 = vunpack.c.l.b16 %v202
    %v235 = vunpack.c.l.b16 %v203
    %v236 = vunpack.c.l.b16 %v204
    %v237 = vunpack.c.l.b16 %v205
    %v238 = vunpack.c.l.b16 %v206
    %v239 = vunpack.c.l.b16 %v207
    %v240 = vunpack.c.l.b16 %v208
    %v241 = vpack.c.b16 %v226, %v225
    %v242 = vpack.c.b16 %v228, %v227
    %v243 = vpack.c.b16 %v230, %v229
    %v244 = vpack.c.b16 %v232, %v231
    %v245 = vpack.c.b16 %v234, %v233
    %v246 = vpack.c.b16 %v236, %v235
    %v247 = vpack.c.b16 %v238, %v237
    %v248 = vpack.c.b16 %v240, %v239
    %257 = vmatprep.subr.bf16.mxu0 0
    %258 = vmatpush1.bf16.msra.mxu0 %v248
    %259 = vmatprep.subr.bf16.mxu0 0
    %260 = vmatpush1.bf16.msra.mxu0 %v247
    %261 = vmatprep.subr.bf16.mxu0 0
    %262 = vmatpush1.bf16.msra.mxu0 %v246
    %263 = vmatprep.subr.bf16.mxu0 0
    %264 = vmatpush1.bf16.msra.mxu0 %v245
    %265 = vmatprep.subr.bf16.mxu0 0
    %266 = vmatpush1.bf16.msra.mxu0 %v244
    %267 = vmatprep.subr.bf16.mxu0 0
    %268 = vmatpush1.bf16.msra.mxu0 %v243
    %269 = vmatprep.subr.bf16.mxu0 0
    %270 = vmatpush1.bf16.msra.mxu0 %v242
    %271 = vmatprep.subr.bf16.mxu0 0
    %272 = vmatpush1.bf16.msra.mxu0 %v241
    %273 = vmatprep.subr.bf16.mxu0 0
    %274 = vmatpush2.bf16.msra.mxu0 0
    %275 = vmatprep.subr.bf16.mxu0 0
    %276 = vmatpush2.bf16.msra.mxu0 0
    %277 = vmatprep.subr.bf16.mxu0 0
    %278 = vmatpush2.bf16.msra.mxu0 0
    %279 = vmatprep.subr.bf16.mxu0 0
    %280 = vmatpush2.bf16.msra.mxu0 0
    %281 = vmatprep.subr.bf16.mxu0 0
    %282 = vmatpush2.bf16.msra.mxu0 0
    %283 = vmatprep.subr.bf16.mxu0 0
    %284 = vmatpush2.bf16.msra.mxu0 0
    %285 = vmatprep.subr.bf16.mxu0 0
    %286 = vmatpush2.bf16.msra.mxu0 0
    %287 = vmatprep.subr.bf16.mxu0 0
    %288 = vmatpush2.bf16.msra.mxu0 0
    %289 = vmatprep.mubr.bf16.mxu0 0
    %290 = vmatmul.mubr.bf16.gmra.mxu0 %v192
    %v291 = vpop.f32.mrf.mxu0
    %v292 = vadd.f32 0.0, %v291
    %v293 = vpop.f32.mrf.mxu0
    %v294 = vpop.f32.mrf.mxu0
    %v295 = vpop.f32.mrf.mxu0
    %296 = vdwg.mxu0
    %v300 = vunpack.c.l.b16 %v109
    %v301 = vunpack.c.h.b16 %v109
    %v302 = vunpack.c.l.b16 %v110
    %v303 = vunpack.c.h.b16 %v110
    %v304 = vunpack.c.l.b16 %v111
    %v305 = vpack.c.b16 %v300, %v300
    %v306 = vpack.c.b16 %v301, %v301
    %v307 = vpack.c.b16 %v302, %v302
    %v308 = vpack.c.b16 %v303, %v303
    %v309 = vpack.c.b16 %v304, %v304
    %v395 = vunpack.c.l.b16 %v112
    %v396 = vunpack.c.l.b16 %v113
    %v397 = vunpack.c.l.b16 %v114
    %v398 = vunpack.c.l.b16 %v115
    %v399 = vunpack.c.l.b16 %v116
    %v400 = vunpack.c.l.b16 %v117
    %v401 = vunpack.c.l.b16 %v118
    %v402 = vunpack.c.l.b16 %v119
    %v403 = vunpack.c.l.b16 %v120
    %v404 = vunpack.c.l.b16 %v121
    %v405 = vunpack.c.l.b16 %v122
    %v406 = vunpack.c.l.b16 %v123
    %v407 = vunpack.c.l.b16 %v124
    %v408 = vunpack.c.l.b16 %v125
    %v409 = vunpack.c.l.b16 %v126
    %v410 = vunpack.c.l.b16 %v127
    %v411 = vunpack.c.l.b16 %v128
    %v412 = vunpack.c.l.b16 %v129
    %v413 = vunpack.c.l.b16 %v130
    %v414 = vunpack.c.l.b16 %v131
    %v415 = vunpack.c.l.b16 %v132
    %v416 = vunpack.c.l.b16 %v133
    %v417 = vunpack.c.l.b16 %v134
    %v418 = vunpack.c.l.b16 %v135
    %v419 = vunpack.c.l.b16 %v136
    %v420 = vunpack.c.l.b16 %v137
    %v421 = vunpack.c.l.b16 %v138
    %v422 = vunpack.c.l.b16 %v139
    %v423 = vunpack.c.l.b16 %v140
    %v424 = vunpack.c.l.b16 %v141
    %v425 = vunpack.c.l.b16 %v142
    %v426 = vunpack.c.l.b16 %v143
    %v427 = vunpack.c.l.b16 %v144
    %v428 = vunpack.c.l.b16 %v145
    %v429 = vunpack.c.l.b16 %v146
    %v430 = vunpack.c.l.b16 %v147
    %v431 = vunpack.c.l.b16 %v148
    %v432 = vunpack.c.l.b16 %v149
    %v433 = vunpack.c.l.b16 %v150
    %v434 = vunpack.c.l.b16 %v151
    %v435 = vunpack.c.l.b16 %v152
    %v436 = vunpack.c.l.b16 %v153
    %v437 = vunpack.c.l.b16 %v154
    %v438 = vunpack.c.l.b16 %v155
    %v439 = vunpack.c.l.b16 %v156
    %v440 = vunpack.c.l.b16 %v157
    %v441 = vunpack.c.l.b16 %v158
    %v442 = vunpack.c.l.b16 %v159
    %v443 = vunpack.c.l.b16 %v160
    %v444 = vunpack.c.l.b16 %v161
    %v445 = vunpack.c.l.b16 %v162
    %v446 = vunpack.c.l.b16 %v163
    %v447 = vunpack.c.l.b16 %v164
    %v448 = vunpack.c.l.b16 %v165
    %v449 = vunpack.c.l.b16 %v166
    %v450 = vunpack.c.l.b16 %v167
    %v451 = vunpack.c.l.b16 %v168
    %v452 = vunpack.c.l.b16 %v169
    %v453 = vunpack.c.l.b16 %v170
    %v454 = vunpack.c.l.b16 %v171
    %v455 = vunpack.c.l.b16 %v172
    %v456 = vunpack.c.l.b16 %v173
    %v457 = vunpack.c.l.b16 %v174
    %v458 = vunpack.c.l.b16 %v175
    %v459 = vunpack.c.l.b16 %v176
    %v460 = vunpack.c.l.b16 %v177
    %v461 = vunpack.c.l.b16 %v178
    %v462 = vunpack.c.l.b16 %v179
    %v463 = vunpack.c.l.b16 %v180
    %v464 = vunpack.c.l.b16 %v181
    %v465 = vunpack.c.l.b16 %v182
    %v466 = vunpack.c.l.b16 %v183
    %v467 = vunpack.c.l.b16 %v184
    %v468 = vunpack.c.l.b16 %v185
    %v469 = vunpack.c.l.b16 %v186
    %v470 = vunpack.c.l.b16 %v187
    %v471 = vunpack.c.l.b16 %v188
    %v472 = vunpack.c.l.b16 %v189
    %v473 = vunpack.c.l.b16 %v190
    %v474 = vunpack.c.l.b16 %v191
    %v475 = vpack.c.b16 %v396, %v395
    %v476 = vpack.c.b16 %v398, %v397
    %v477 = vpack.c.b16 %v400, %v399
    %v478 = vpack.c.b16 %v402, %v401
    %v479 = vpack.c.b16 %v404, %v403
    %v480 = vpack.c.b16 %v406, %v405
    %v481 = vpack.c.b16 %v408, %v407
    %v482 = vpack.c.b16 %v410, %v409
    %v483 = vpack.c.b16 %v412, %v411
    %v484 = vpack.c.b16 %v414, %v413
    %v485 = vpack.c.b16 %v416, %v415
    %v486 = vpack.c.b16 %v418, %v417
    %v487 = vpack.c.b16 %v420, %v419
    %v488 = vpack.c.b16 %v422, %v421
    %v489 = vpack.c.b16 %v424, %v423
    %v490 = vpack.c.b16 %v426, %v425
    %v491 = vpack.c.b16 %v428, %v427
    %v492 = vpack.c.b16 %v430, %v429
    %v493 = vpack.c.b16 %v432, %v431
    %v494 = vpack.c.b16 %v434, %v433
    %v495 = vpack.c.b16 %v436, %v435
    %v496 = vpack.c.b16 %v438, %v437
    %v497 = vpack.c.b16 %v440, %v439
    %v498 = vpack.c.b16 %v442, %v441
    %v499 = vpack.c.b16 %v444, %v443
    %v500 = vpack.c.b16 %v446, %v445
    %v501 = vpack.c.b16 %v448, %v447
    %v502 = vpack.c.b16 %v450, %v449
    %v503 = vpack.c.b16 %v452, %v451
    %v504 = vpack.c.b16 %v454, %v453
    %v505 = vpack.c.b16 %v456, %v455
    %v506 = vpack.c.b16 %v458, %v457
    %v507 = vpack.c.b16 %v460, %v459
    %v508 = vpack.c.b16 %v462, %v461
    %v509 = vpack.c.b16 %v464, %v463
    %v510 = vpack.c.b16 %v466, %v465
    %v511 = vpack.c.b16 %v468, %v467
    %v512 = vpack.c.b16 %v470, %v469
    %v513 = vpack.c.b16 %v472, %v471
    %v514 = vpack.c.b16 %v474, %v473
    %555 = vmatprep.subr.bf16.mxu0 0
    %556 = vmatpush1.bf16.msra.mxu0 %v482
    %557 = vmatprep.subr.bf16.mxu0 0
    %558 = vmatpush1.bf16.msra.mxu0 %v481
    %559 = vmatprep.subr.bf16.mxu0 0
    %560 = vmatpush1.bf16.msra.mxu0 %v480
    %561 = vmatprep.subr.bf16.mxu0 0
    %562 = vmatpush1.bf16.msra.mxu0 %v479
    %563 = vmatprep.subr.bf16.mxu0 0
    %564 = vmatpush1.bf16.msra.mxu0 %v478
    %565 = vmatprep.subr.bf16.mxu0 0
    %566 = vmatpush1.bf16.msra.mxu0 %v477
    %567 = vmatprep.subr.bf16.mxu0 0
    %568 = vmatpush1.bf16.msra.mxu0 %v476
    %569 = vmatprep.subr.bf16.mxu0 0
    %570 = vmatpush1.bf16.msra.mxu0 %v475
    %571 = vmatprep.subr.bf16.mxu0 0
    %572 = vmatpush2.bf16.msra.mxu0 %v490
    %573 = vmatprep.subr.bf16.mxu0 0
    %574 = vmatpush2.bf16.msra.mxu0 %v489
    %575 = vmatprep.subr.bf16.mxu0 0
    %576 = vmatpush2.bf16.msra.mxu0 %v488
    %577 = vmatprep.subr.bf16.mxu0 0
    %578 = vmatpush2.bf16.msra.mxu0 %v487
    %579 = vmatprep.subr.bf16.mxu0 0
    %580 = vmatpush2.bf16.msra.mxu0 %v486
    %581 = vmatprep.subr.bf16.mxu0 0
    %582 = vmatpush2.bf16.msra.mxu0 %v485
    %583 = vmatprep.subr.bf16.mxu0 0
    %584 = vmatpush2.bf16.msra.mxu0 %v484
    %585 = vmatprep.subr.bf16.mxu0 0
    %586 = vmatpush2.bf16.msra.mxu0 %v483
    %587 = vmatprep.mubr.bf16.mxu0 %v306
    %588 = vmatmul.mubr.bf16.gmra.mxu0 %v305
    %v589 = vpop.f32.mrf.mxu0
    %v590 = vadd.f32 %v292, %v589
    %v591 = vpop.f32.mrf.mxu0
    %v592 = vpop.f32.mrf.mxu0
    %v593 = vpop.f32.mrf.mxu0
    %594 = vdwg.mxu0
    %595 = vmatprep.subr.bf16.mxu0 0
    %596 = vmatpush1.bf16.msra.mxu0 %v498
    %597 = vmatprep.subr.bf16.mxu0 0
    %598 = vmatpush1.bf16.msra.mxu0 %v497
    %599 = vmatprep.subr.bf16.mxu0 0
    %600 = vmatpush1.bf16.msra.mxu0 %v496
    %601 = vmatprep.subr.bf16.mxu0 0
    %602 = vmatpush1.bf16.msra.mxu0 %v495
    %603 = vmatprep.subr.bf16.mxu0 0
    %604 = vmatpush1.bf16.msra.mxu0 %v494
    %605 = vmatprep.subr.bf16.mxu0 0
    %606 = vmatpush1.bf16.msra.mxu0 %v493
    %607 = vmatprep.subr.bf16.mxu0 0
    %608 = vmatpush1.bf16.msra.mxu0 %v492
    %609 = vmatprep.subr.bf16.mxu0 0
    %610 = vmatpush1.bf16.msra.mxu0 %v491
    %611 = vmatprep.subr.bf16.mxu0 0
    %612 = vmatpush2.bf16.msra.mxu0 %v506
    %613 = vmatprep.subr.bf16.mxu0 0
    %614 = vmatpush2.bf16.msra.mxu0 %v505
    %615 = vmatprep.subr.bf16.mxu0 0
    %616 = vmatpush2.bf16.msra.mxu0 %v504
    %617 = vmatprep.subr.bf16.mxu0 0
    %618 = vmatpush2.bf16.msra.mxu0 %v503
    %619 = vmatprep.subr.bf16.mxu0 0
    %620 = vmatpush2.bf16.msra.mxu0 %v502
    %621 = vmatprep.subr.bf16.mxu0 0
    %622 = vmatpush2.bf16.msra.mxu0 %v501
    %623 = vmatprep.subr.bf16.mxu0 0
    %624 = vmatpush2.bf16.msra.mxu0 %v500
    %625 = vmatprep.subr.bf16.mxu0 0
    %626 = vmatpush2.bf16.msra.mxu0 %v499
    %627 = vmatprep.mubr.bf16.mxu0 %v308
    %628 = vmatmul.mubr.bf16.gmra.mxu0 %v307
    %v629 = vpop.f32.mrf.mxu0
    %v630 = vadd.f32 %v590, %v629
    %v631 = vpop.f32.mrf.mxu0
    %v632 = vpop.f32.mrf.mxu0
    %v633 = vpop.f32.mrf.mxu0
    %634 = vdwg.mxu0
    %635 = vmatprep.subr.bf16.mxu0 0
    %636 = vmatpush1.bf16.msra.mxu0 %v514
    %637 = vmatprep.subr.bf16.mxu0 0
    %638 = vmatpush1.bf16.msra.mxu0 %v513
    %639 = vmatprep.subr.bf16.mxu0 0
    %640 = vmatpush1.bf16.msra.mxu0 %v512
    %641 = vmatprep.subr.bf16.mxu0 0
    %642 = vmatpush1.bf16.msra.mxu0 %v511
    %643 = vmatprep.subr.bf16.mxu0 0
    %644 = vmatpush1.bf16.msra.mxu0 %v510
    %645 = vmatprep.subr.bf16.mxu0 0
    %646 = vmatpush1.bf16.msra.mxu0 %v509
    %647 = vmatprep.subr.bf16.mxu0 0
    %648 = vmatpush1.bf16.msra.mxu0 %v508
    %649 = vmatprep.subr.bf16.mxu0 0
    %650 = vmatpush1.bf16.msra.mxu0 %v507
    %651 = vmatprep.subr.bf16.mxu0 0
    %652 = vmatpush2.bf16.msra.mxu0 0
    %653 = vmatprep.subr.bf16.mxu0 0
    %654 = vmatpush2.bf16.msra.mxu0 0
    %655 = vmatprep.subr.bf16.mxu0 0
    %656 = vmatpush2.bf16.msra.mxu0 0
    %657 = vmatprep.subr.bf16.mxu0 0
    %658 = vmatpush2.bf16.msra.mxu0 0
    %659 = vmatprep.subr.bf16.mxu0 0
    %660 = vmatpush2.bf16.msra.mxu0 0
    %661 = vmatprep.subr.bf16.mxu0 0
    %662 = vmatpush2.bf16.msra.mxu0 0
    %663 = vmatprep.subr.bf16.mxu0 0
    %664 = vmatpush2.bf16.msra.mxu0 0
    %665 = vmatprep.subr.bf16.mxu0 0
    %666 = vmatpush2.bf16.msra.mxu0 0
    %667 = vmatprep.mubr.bf16.mxu0 0
    %668 = vmatmul.mubr.bf16.gmra.mxu0 %v309
    %v669 = vpop.f32.mrf.mxu0
    %v670 = vadd.f32 %v630, %v669
    %v671 = vpop.f32.mrf.mxu0
    %v672 = vpop.f32.mrf.mxu0
    %v673 = vpop.f32.mrf.mxu0
    %674 = vdwg.mxu0
    %v675 = vld [vmem:[#allocation7] sm:$0xf]
    %v676 = vld [vmem:[#allocation11] sm:$0xf]
    %v677 = vld [vmem:[#allocation11 + $0x4] sm:$0xf]
    %v678 = vld [vmem:[#allocation11 + $0x8] sm:$0xf]
    %v679 = vld [vmem:[#allocation11 + $0xc] sm:$0xf]
    %v680 = vld [vmem:[#allocation11 + $0x10] sm:$0xf]
    %v681 = vld [vmem:[#allocation11 + $0x14] sm:$0xf]
    %v682 = vld [vmem:[#allocation11 + $0x18] sm:$0xf]
    %v683 = vld [vmem:[#allocation11 + $0x1c] sm:$0xf]
    %v684 = vld [vmem:[#allocation11 + $0x20] sm:$0xf]
    %v685 = vld [vmem:[#allocation11 + $0x24] sm:$0xf]
    %v686 = vld [vmem:[#allocation11 + $0x28] sm:$0xf]
    %v687 = vld [vmem:[#allocation11 + $0x2c] sm:$0xf]
    %v688 = vld [vmem:[#allocation11 + $0x30] sm:$0xf]
    %v689 = vld [vmem:[#allocation11 + $0x34] sm:$0xf]
    %v690 = vld [vmem:[#allocation11 + $0x38] sm:$0xf]
    %v691 = vld [vmem:[#allocation11 + $0x3c] sm:$0xf]
    %v708 = vunpack.c.l.b16 %v676
    %v709 = vunpack.c.l.b16 %v677
    %v710 = vunpack.c.l.b16 %v678
    %v711 = vunpack.c.l.b16 %v679
    %v712 = vunpack.c.l.b16 %v680
    %v713 = vunpack.c.l.b16 %v681
    %v714 = vunpack.c.l.b16 %v682
    %v715 = vunpack.c.l.b16 %v683
    %v716 = vunpack.c.l.b16 %v684
    %v717 = vunpack.c.l.b16 %v685
    %v718 = vunpack.c.l.b16 %v686
    %v719 = vunpack.c.l.b16 %v687
    %v720 = vunpack.c.l.b16 %v688
    %v721 = vunpack.c.l.b16 %v689
    %v722 = vunpack.c.l.b16 %v690
    %v723 = vunpack.c.l.b16 %v691
    %v724 = vpack.c.b16 %v709, %v708
    %v725 = vpack.c.b16 %v711, %v710
    %v726 = vpack.c.b16 %v713, %v712
    %v727 = vpack.c.b16 %v715, %v714
    %v728 = vpack.c.b16 %v717, %v716
    %v729 = vpack.c.b16 %v719, %v718
    %v730 = vpack.c.b16 %v721, %v720
    %v731 = vpack.c.b16 %v723, %v722
    %740 = vmatprep.subr.bf16.mxu0 0
    %741 = vmatpush1.bf16.msra.mxu0 %v731
    %742 = vmatprep.subr.bf16.mxu0 0
    %743 = vmatpush1.bf16.msra.mxu0 %v730
    %744 = vmatprep.subr.bf16.mxu0 0
    %745 = vmatpush1.bf16.msra.mxu0 %v729
    %746 = vmatprep.subr.bf16.mxu0 0
    %747 = vmatpush1.bf16.msra.mxu0 %v728
    %748 = vmatprep.subr.bf16.mxu0 0
    %749 = vmatpush1.bf16.msra.mxu0 %v727
    %750 = vmatprep.subr.bf16.mxu0 0
    %751 = vmatpush1.bf16.msra.mxu0 %v726
    %752 = vmatprep.subr.bf16.mxu0 0
    %753 = vmatpush1.bf16.msra.mxu0 %v725
    %754 = vmatprep.subr.bf16.mxu0 0
    %755 = vmatpush1.bf16.msra.mxu0 %v724
    %756 = vmatprep.subr.bf16.mxu0 0
    %757 = vmatpush2.bf16.msra.mxu0 0
    %758 = vmatprep.subr.bf16.mxu0 0
    %759 = vmatpush2.bf16.msra.mxu0 0
    %760 = vmatprep.subr.bf16.mxu0 0
    %761 = vmatpush2.bf16.msra.mxu0 0
    %762 = vmatprep.subr.bf16.mxu0 0
    %763 = vmatpush2.bf16.msra.mxu0 0
    %764 = vmatprep.subr.bf16.mxu0 0
    %765 = vmatpush2.bf16.msra.mxu0 0
    %766 = vmatprep.subr.bf16.mxu0 0
    %767 = vmatpush2.bf16.msra.mxu0 0
    %768 = vmatprep.subr.bf16.mxu0 0
    %769 = vmatpush2.bf16.msra.mxu0 0
    %770 = vmatprep.subr.bf16.mxu0 0
    %771 = vmatpush2.bf16.msra.mxu0 0
    %772 = vmatprep.mubr.bf16.mxu0 0
    %773 = vmatmul.mubr.bf16.gmra.mxu0 %v675
    %v774 = vpop.f32.mrf.mxu0
    %v775 = vadd.f32 0.0, %v774
    %v776 = vpop.f32.mrf.mxu0
    %v777 = vpop.f32.mrf.mxu0
    %v778 = vpop.f32.mrf.mxu0
    %779 = vdwg.mxu0
    %v780 = vadd.f32 %v670, %v775
    %v781 = vld [vmem:[%s7] sm:$0x1]
    %v783 = vlaneseq
    %v784 = vshrl.u32 %v783, 7
    %v785 = vsub.s32 0, %v784
    %v786 = vrot.slane %v781, %v785
    %v788 = vadd.f32 %v780, %v786
    %v789 = vlaneseq
    %v790 = vand.u32 %v789, 127
    %vm791 = vcmp.lt.s32.totalorder %v790, 74
    %v792 = vsel %vm791, %v788, -inf
    %793 = vmax.xlane.f32.xlu0 %v792
    %v794 = vpop.xlane.xlu0 %793
    %v795 = vld [vmem:[%s3] sm:$0xf]
    %vm796 = vcmp.gt.bf16.partialorder %v795, 0
    %v797 = vsub.f32 %v788, %v794
    %v798 = vsel %vm796, 65537, 0
    %v799 = vunpack.c.l.b16 %v798
    %vm800 = vcmp.ne.s32.totalorder %v799, 0
    %v801 = vsel %vm800, %v797, -inf
    %v802 = vmul.f32 %v801, 1.442695
    %v803 = vpow.pop %v802
    %804 = vadd.xlane.f32.xlu0 %v803
    %v805 = vpop.xlane.xlu0 %804
    %v806 = vmax.f32 %v805, 1e-12
    %v807 = vrcp.pop %v806
    %v808 = vmul.f32 %v803, %v807
    %809 = vst [vmem:[#allocation13] sm:$0xff] %v808
    // Predicated region
    $region58: #{tpu_custom_call.1} parent=1 // pred_check
      _
    $region59: #{tpu_custom_call.1} parent=1 // pred_check_branch
      %811 = sbr.rel (0) target = $region61
    $region60: #{tpu_custom_call.1} parent=1 // pred_region
      %s813 = ssub.s32 128, 128
      %814 = vsyncadd [#allocation4], %s813
      %s816 = sshll.u32 [#allocation13], 4
      %s817 = int_to_ptr.vmem [resolvable:$true] %s816
      %819 = dma.vmem_to_hbm [thread:$0]  %s817, 128, %s8, [#allocation4]
    $region61: #{tpu_custom_call.1} parent=1 // pred_fallthru
      _
    // Predicated region
    $region62: #{tpu_custom_call.1} parent=1 // pred_check
      _
    $region63: #{tpu_custom_call.1} parent=1 // pred_check_branch
      %821 = sbr.rel (0) target = $region65
    $region64: #{tpu_custom_call.1} parent=1 // pred_region
      %822 = dma.done [#allocation4], 128
    $region65: #{tpu_custom_call.1} parent=1 // pred_fallthru
      _
    %823 = vsyncpa [#allocation3], 1
    %824 = vsyncpa [#allocation6], 1
    %825 = vsyncpa [#allocation9], 1
    %826 = vsyncpa [#allocation12], 1
    %827 = vsyncpa [#allocation4], 1

</llo_original>
